<compile_context>
chip_gen: v7x
topology: tpu7x:2x2x1
jax: 0.10.0
libtpu: 0.0.40
codegen_flags: <defaults>
</compile_context>

<pallas_src>
import jax
import jax.numpy as jnp
from jax.experimental import pallas as pl
from jax.experimental.pallas import tpu as pltpu

_LANE = 128
_TARGET_BLOCK_BYTES = 4 * 1024 * 1024  # per-buffer slab target; 4 such buffers
                                       # (in+out, double-buffered) stay well
                                       # inside 32 MiB scoped VMEM on all chips.


# ----------------------------------------------------------------------------
# Kernels
# ----------------------------------------------------------------------------
def _make_fused_kernel(inv_n):
    """Fused mean -> fc1 -> ReLU -> fc2 -> sigmoid -> rescale for a [TB,C,Np] slab."""
    def kernel(x_ref, w1t_ref, b1_ref, w2t_ref, b2_ref, o_ref):
        x = x_ref[...].astype(jnp.float32)                       # [TB, C, Np]
        # channel means over the (zero-padded) lane axis; divide by the true N
        m = jnp.sum(x, axis=-1) * inv_n                          # [TB, C]
        # fc1 + ReLU   (weights pre-transposed to [C, Cr] on the host, tiny)
        h = jnp.dot(m, w1t_ref[...],
                    preferred_element_type=jnp.float32) + b1_ref[...]   # [TB, Cr]
        h = jnp.maximum(h, 0.0)
        # fc2 + sigmoid
        s = jnp.dot(h, w2t_ref[...],
                    preferred_element_type=jnp.float32) + b2_ref[...]   # [TB, C]
        s = 1.0 / (1.0 + jnp.exp(-s))
        # channel excitation: broadcast [TB, C, 1] across the lane (N) axis
        o_ref[...] = (x * s[:, :, None]).astype(o_ref.dtype)
    return kernel


def _reduce_kernel(x_ref, sum_ref):
    """Accumulate per-channel sums over N tiles: x [1,C,TN] -> sum [1,C,1]."""
    @pl.when(pl.program_id(1) == 0)
    def _():
        sum_ref[...] = jnp.zeros_like(sum_ref)
    sum_ref[...] += jnp.sum(x_ref[...].astype(jnp.float32), axis=-1, keepdims=True)


def _scale_kernel(x_ref, s_ref, o_ref):
    """Rescale an x tile [1,C,TN] by the per-channel sigmoid scale [1,C,1]."""
    o_ref[...] = (x_ref[...].astype(jnp.float32) * s_ref[...]).astype(o_ref.dtype)


def _io_spec(block_shape, index_map, depth):
    """BlockSpec, optionally with deeper multi-buffering (fallback-safe)."""
    if depth > 2:
        try:
            return pl.BlockSpec(block_shape, index_map,
                                pipeline_mode=pl.Buffered(depth))
        except TypeError:
            pass
    return pl.BlockSpec(block_shape, index_map)


# ----------------------------------------------------------------------------
# Wrapper
# ----------------------------------------------------------------------------
def pointnet_cse_forward(params, points, *, block_bytes=_TARGET_BLOCK_BYTES):
    """points: [B, C, N] (any float dtype) -> out: [B, C, N] (same dtype)."""
    w1, b1, w2, b2 = params                     # [Cr,C], [Cr], [C,Cr], [C]
    B, C, N = points.shape
    Cr = w1.shape[0]
    out_dtype = points.dtype
    itemsize = jnp.dtype(out_dtype).itemsize

    # Pad N to a multiple of 128 so every load/store is lane-dense; the mean
    # divides by the true N so zero padding does not change the result.
    n_pad = (-N) % _LANE
    x = points if n_pad == 0 else jnp.pad(points, ((0, 0), (0, 0), (0, n_pad)))
    Np = N + n_pad
    inv_n = 1.0 / float(N)

    # Tiny weights: transpose/reshape once on the host (consumed as row-batched
    # matmuls in-kernel; no in-kernel weight transposes).
    w1t = jnp.transpose(w1).astype(jnp.float32)          # [C, Cr]
    w2t = jnp.transpose(w2).astype(jnp.float32)          # [Cr, C]
    b1r = b1.reshape(1, Cr).astype(jnp.float32)
    b2r = b2.reshape(1, C).astype(jnp.float32)
    weight_bytes = 4 * (w1t.size + w2t.size + b1r.size + b2r.size)

    per_elem_bytes = C * Np * itemsize

    if per_elem_bytes <= block_bytes:
        # ------------------ single fused kernel, TB batch elems / step -------
        max_tb = B if B < 8 else B // 2     # leave >=2 steps for v7x's 2 TCs
        tb = 1
        for cand in range(1, max_tb + 1):
            if B % cand == 0 and cand * per_elem_bytes <= block_bytes:
                tb = cand
        steps = B // tb
        blk = tb * per_elem_bytes
        depth = 3 if (steps >= 4 and blk < (1 << 20)) else 2
        vmem_limit = int(min(max(2 * depth * blk + 2 * weight_bytes + (4 << 20),
                                 32 << 20), 48 << 20))
        cost = pl.CostEstimate(
            flops=int(4 * B * C * Np + 4 * B * C * Cr),
            transcendentals=int(B * C),
            bytes_accessed=int(2 * B * C * Np * itemsize + weight_bytes))

        out = pl.pallas_call(
            _make_fused_kernel(inv_n),
            out_shape=jax.ShapeDtypeStruct((B, C, Np), out_dtype),
            grid=(steps,),
            in_specs=[
                _io_spec((tb, C, Np), lambda b: (b, 0, 0), depth),   # x slab
                pl.BlockSpec((C, Cr), lambda b: (0, 0)),             # fc1 W^T
                pl.BlockSpec((1, Cr), lambda b: (0, 0)),             # fc1 bias
                pl.BlockSpec((Cr, C), lambda b: (0, 0)),             # fc2 W^T
                pl.BlockSpec((1, C), lambda b: (0, 0)),              # fc2 bias
            ],
            out_specs=_io_spec((tb, C, Np), lambda b: (b, 0, 0), depth),
            compiler_params=pltpu.CompilerParams(
                dimension_semantics=("parallel",),
                vmem_limit_bytes=vmem_limit),
            cost_estimate=cost,
        )(x, w1t, b1r, w2t, b2r)
    else:
        # ------------- VMEM-budget fallback (v7x / large C*N): N-tiled -------
        tn = _LANE
        for cand in range(_LANE, Np + 1, _LANE):
            if Np % cand == 0 and C * cand * itemsize <= block_bytes:
                tn = cand
        nN = Np // tn
        blk = C * tn * itemsize
        vmem_limit = int(min(max(4 * blk + (4 << 20), 32 << 20), 48 << 20))

        # Pass 1: channel sums over N tiles (accumulator resident across n).
        sums = pl.pallas_call(
            _reduce_kernel,
            out_shape=jax.ShapeDtypeStruct((B, C, 1), jnp.float32),
            grid=(B, nN),
            in_specs=[pl.BlockSpec((1, C, tn), lambda b, n: (b, 0, n))],
            out_specs=pl.BlockSpec((1, C, 1), lambda b, n: (b, 0, 0)),
            compiler_params=pltpu.CompilerParams(
                dimension_semantics=("parallel", "arbitrary"),
                vmem_limit_bytes=vmem_limit),
            cost_estimate=pl.CostEstimate(
                flops=int(B * C * Np), transcendentals=0,
                bytes_accessed=int(B * C * Np * itemsize)),
        )(x)

        # Tiny FC excitation path in plain JAX (negligible work).
        mean = sums[:, :, 0] * inv_n                                  # [B, C]
        h = jnp.maximum(mean @ w1t + b1r, 0.0)                        # [B, Cr]
        scale = jax.nn.sigmoid(h @ w2t + b2r)                         # [B, C]
        scale_col = scale.reshape(B, C, 1).astype(jnp.float32)

        # Pass 2: rescale x tiles by the per-channel scale.
        out = pl.pallas_call(
            _scale_kernel,
            out_shape=jax.ShapeDtypeStruct((B, C, Np), out_dtype),
            grid=(B, nN),
            in_specs=[pl.BlockSpec((1, C, tn), lambda b, n: (b, 0, n)),
                      pl.BlockSpec((1, C, 1), lambda b, n: (b, 0, 0))],
            out_specs=pl.BlockSpec((1, C, tn), lambda b, n: (b, 0, n)),
            compiler_params=pltpu.CompilerParams(
                dimension_semantics=("parallel", "parallel"),
                vmem_limit_bytes=vmem_limit),
            cost_estimate=pl.CostEstimate(
                flops=int(B * C * Np), transcendentals=0,
                bytes_accessed=int(2 * B * C * Np * itemsize)),
        )(x, scale_col)

    return out if n_pad == 0 else out[:, :, :N]


# ----------------------------------------------------------------------------
# Deterministic synthetic parameters + plain-JAX reference for validation
# ----------------------------------------------------------------------------
def init_params(key, in_channel, r=2):
    # matches nn.Linear weight layout: [out_features, in_features]
    num_reduced = in_channel // r
    k1, k2, k3, k4 = jax.random.split(key, 4)
    w1 = 0.1 * jax.random.normal(k1, (num_reduced, in_channel), jnp.float32)
    b1 = 0.1 * jax.random.normal(k2, (num_reduced,), jnp.float32)
    w2 = 0.1 * jax.random.normal(k3, (in_channel, num_reduced), jnp.float32)
    b2 = 0.1 * jax.random.normal(k4, (in_channel,), jnp.float32)
    return (w1, b1, w2, b2)


def cse_reference(params, points):
    # TODO(synk): the fc=False (Conv1d) branch only differs by an unsqueeze /
    #             squeeze around the identical affine map; not exercised here.
    w1, b1, w2, b2 = params
    mask = jnp.mean(points, axis=2)                       # [B, C]
    mask = jnp.maximum(mask @ w1.T + b1, 0.0)             # [B, Cr]
    mask = jax.nn.sigmoid(mask @ w2.T + b2)               # [B, C]
    return points * mask[:, :, None]                      # [B, C, N]


# ----------------------------------------------------------------------------
if __name__ == "__main__":
    key = jax.random.PRNGKey(0)
    B, C, N = 2, 32, 128          # batch, in_channel, num points
    r = 2

    k_pts, k_par, k_pts2 = jax.random.split(key, 3)
    params = init_params(k_par, C, r=r)

    # Path 1: fused single-kernel path (whole [TB, C, N] slab per grid step).
    points = jax.random.normal(k_pts, (B, C, N), jnp.float32)
    out = pointnet_cse_forward(params, points)
    jax.block_until_ready(out)
    ref = cse_reference(params, points)
    assert out.shape == points.shape and out.dtype == points.dtype
    assert bool(jnp.all(jnp.isfinite(out)))
    assert bool(jnp.allclose(out, ref, rtol=1e-5, atol=1e-5)), (
        float(jnp.max(jnp.abs(out - ref))))

    # Path 2: VMEM-budget fallback (reduce + scale kernels, N tiled), forced
    # here with a tiny per-block budget so the fallback is validated too.
    points2 = jax.random.normal(k_pts2, (B, C, 2 * N), jnp.float32)
    out2 = pointnet_cse_forward(params, points2, block_bytes=C * 128 * 4)
    jax.block_until_ready(out2)
    ref2 = cse_reference(params, points2)
    assert out2.shape == points2.shape
    assert bool(jnp.allclose(out2, ref2, rtol=1e-5, atol=1e-5)), (
        float(jnp.max(jnp.abs(out2 - ref2))))

    print("KERNEL_OK")
</pallas_src>

<mosaic_0001>
module attributes {stable_mosaic.version = 11 : i64} {
  func.func @kernel(%arg0: i32, %arg1: memref<2x32x128xf32, #tpu.memory_space<vmem>>, %arg2: memref<32x16xf32, #tpu.memory_space<vmem>>, %arg3: memref<1x16xf32, #tpu.memory_space<vmem>>, %arg4: memref<16x32xf32, #tpu.memory_space<vmem>>, %arg5: memref<1x32xf32, #tpu.memory_space<vmem>>, %arg6: memref<2x32x128xf32, #tpu.memory_space<vmem>>) attributes {dimension_semantics = [#tpu.dimension_semantics<parallel>], iteration_bounds = array<i64: 1>, scalar_prefetch = 0 : i64, scratch_operands = 0 : i64, tpu.core_type = #tpu.core_type<tc>, window_params = [{transform_indices = @transform_0, window_bounds = array<i64: 2, 32, 128>}, {pipeline_mode = #tpu.pipeline_mode<synchronous>, transform_indices = @transform_1, window_bounds = array<i64: 32, 16>}, {pipeline_mode = #tpu.pipeline_mode<synchronous>, transform_indices = @transform_2, window_bounds = array<i64: 1, 16>}, {pipeline_mode = #tpu.pipeline_mode<synchronous>, transform_indices = @transform_3, window_bounds = array<i64: 16, 32>}, {pipeline_mode = #tpu.pipeline_mode<synchronous>, transform_indices = @transform_4, window_bounds = array<i64: 1, 32>}, {transform_indices = @transform_5, window_bounds = array<i64: 2, 32, 128>}]} {
    %c0 = arith.constant 0 : index
    %c0_0 = arith.constant 0 : index
    %c0_1 = arith.constant 0 : index
    %0 = vector.load %arg1[%c0, %c0_0, %c0_1] : memref<2x32x128xf32, #tpu.memory_space<vmem>>, vector<2x32x128xf32>
    %cst = arith.constant dense<0.000000e+00> : vector<2x32xf32>
    %1 = vector.multi_reduction <add>, %0, %cst [2] : vector<2x32x128xf32> to vector<2x32xf32>
    %cst_2 = arith.constant 7.812500e-03 : f32
    %2 = vector.broadcast %cst_2 : f32 to vector<2x32xf32>
    %3 = arith.mulf %1, %2 : vector<2x32xf32>
    %c0_3 = arith.constant 0 : index
    %c0_4 = arith.constant 0 : index
    %4 = vector.load %arg2[%c0_3, %c0_4] : memref<32x16xf32, #tpu.memory_space<vmem>>, vector<32x16xf32>
    %cst_5 = arith.constant dense<0.000000e+00> : vector<2x16xf32>
    %5 = tpu.matmul %3, %4, %cst_5 {dimension_numbers = #tpu.dot_dimension_numbers<[1], [0], [0], [1], [0, 0, 1, 1], [], []>} : vector<2x32xf32>, vector<32x16xf32>, vector<2x16xf32> -> vector<2x16xf32>
    %c0_6 = arith.constant 0 : index
    %c0_7 = arith.constant 0 : index
    %6 = vector.load %arg3[%c0_6, %c0_7] : memref<1x16xf32, #tpu.memory_space<vmem>>, vector<1x16xf32>
    %7 = vector.broadcast %6 : vector<1x16xf32> to vector<2x16xf32>
    %8 = arith.addf %5, %7 : vector<2x16xf32>
    %cst_8 = arith.constant 0.000000e+00 : f32
    %9 = vector.broadcast %cst_8 : f32 to vector<2x16xf32>
    %10 = arith.maximumf %8, %9 : vector<2x16xf32>
    %c0_9 = arith.constant 0 : index
    %c0_10 = arith.constant 0 : index
    %11 = vector.load %arg4[%c0_9, %c0_10] : memref<16x32xf32, #tpu.memory_space<vmem>>, vector<16x32xf32>
    %cst_11 = arith.constant dense<0.000000e+00> : vector<2x32xf32>
    %12 = tpu.matmul %10, %11, %cst_11 {dimension_numbers = #tpu.dot_dimension_numbers<[1], [0], [0], [1], [0, 0, 1, 1], [], []>} : vector<2x16xf32>, vector<16x32xf32>, vector<2x32xf32> -> vector<2x32xf32>
    %c0_12 = arith.constant 0 : index
    %c0_13 = arith.constant 0 : index
    %13 = vector.load %arg5[%c0_12, %c0_13] : memref<1x32xf32, #tpu.memory_space<vmem>>, vector<1x32xf32>
    %14 = vector.broadcast %13 : vector<1x32xf32> to vector<2x32xf32>
    %15 = arith.addf %12, %14 : vector<2x32xf32>
    %cst_14 = arith.constant 0.000000e+00 : f32
    %16 = vector.broadcast %cst_14 : f32 to vector<2x32xf32>
    %17 = arith.subf %16, %15 : vector<2x32xf32>
    %18 = math.exp %17 : vector<2x32xf32>
    %cst_15 = arith.constant 1.000000e+00 : f32
    %19 = vector.broadcast %cst_15 : f32 to vector<2x32xf32>
    %20 = arith.addf %19, %18 : vector<2x32xf32>
    %cst_16 = arith.constant 1.000000e+00 : f32
    %21 = vector.broadcast %cst_16 : f32 to vector<2x32xf32>
    %22 = arith.divf %21, %20 : vector<2x32xf32>
    %23 = vector.shape_cast %22 : vector<2x32xf32> to vector<2x32x1xf32>
    %24 = vector.broadcast %23 : vector<2x32x1xf32> to vector<2x32x128xf32>
    %25 = arith.mulf %0, %24 : vector<2x32x128xf32>
    %c0_17 = arith.constant 0 : index
    %c0_18 = arith.constant 0 : index
    %c0_19 = arith.constant 0 : index
    %26 = vector.load %arg6[%c0_17, %c0_18, %c0_19] : memref<2x32x128xf32, #tpu.memory_space<vmem>>, vector<2x32x128xf32>
    tpu.vector_store %arg6[%c0_17, %c0_18, %c0_19], %25 {strides = array<i32>} : memref<2x32x128xf32, #tpu.memory_space<vmem>>, vector<2x32x128xf32>,
    return
  }
  func.func @transform_0(%arg0: i32) -> (i32, i32, i32) {
    %c0_i32 = arith.constant 0 : i32
    %c0_i32_0 = arith.constant 0 : i32
    %c0_i32_1 = arith.constant 0 : i32
    return %arg0, %c0_i32, %c0_i32_0 : i32, i32, i32
  }
  func.func @transform_1(%arg0: i32) -> (i32, i32) {
    %c0_i32 = arith.constant 0 : i32
    %c0_i32_0 = arith.constant 0 : i32
    %c0_i32_1 = arith.constant 0 : i32
    return %c0_i32, %c0_i32_0 : i32, i32
  }
  func.func @transform_2(%arg0: i32) -> (i32, i32) {
    %c0_i32 = arith.constant 0 : i32
    %c0_i32_0 = arith.constant 0 : i32
    %c0_i32_1 = arith.constant 0 : i32
    return %c0_i32, %c0_i32_0 : i32, i32
  }
  func.func @transform_3(%arg0: i32) -> (i32, i32) {
    %c0_i32 = arith.constant 0 : i32
    %c0_i32_0 = arith.constant 0 : i32
    %c0_i32_1 = arith.constant 0 : i32
    return %c0_i32, %c0_i32_0 : i32, i32
  }
  func.func @transform_4(%arg0: i32) -> (i32, i32) {
    %c0_i32 = arith.constant 0 : i32
    %c0_i32_0 = arith.constant 0 : i32
    %c0_i32_1 = arith.constant 0 : i32
    return %c0_i32, %c0_i32_0 : i32, i32
  }
  func.func @transform_5(%arg0: i32) -> (i32, i32, i32) {
    %c0_i32 = arith.constant 0 : i32
    %c0_i32_0 = arith.constant 0 : i32
    %c0_i32_1 = arith.constant 0 : i32
    return %arg0, %c0_i32, %c0_i32_0 : i32, i32, i32
  }
}

</mosaic_0001>

<llo_original>
// kernel: tpu_custom_call.1
$region0: #{tpu_custom_call.1}
  #allocation0 [shape = 'u32[]', space=smem, size = 0x4, offset = 0x4, fixed_abs, tag = 'smem constant byte address 0x4 - core index']
  #allocation1 [shape = 'u32[144,128]{1,0:T(1,128)}', space=vmem, size = 0x12000, scoped, tag = 'internal scratch']
  %s0 = inlined_call_operand.hbm [shape: f32[2,32,128], index: 0, kind: input, shape index: {}]
  %s1 = inlined_call_operand.vmem [shape: f32[32,16], index: 1, kind: input, shape index: {}]
  %s2 = inlined_call_operand.vmem [shape: f32[1,16], index: 2, kind: input, shape index: {}]
  %s3 = inlined_call_operand.vmem [shape: f32[16,32], index: 3, kind: input, shape index: {}]
  %s4 = inlined_call_operand.vmem [shape: f32[1,32], index: 4, kind: input, shape index: {}]
  %s5 = inlined_call_operand.hbm [shape: f32[2,32,128], index: 5, kind: output, shape index: {}]
  %s6 = sld [smem:[#allocation0]]
  $region34: #{tpu_custom_call.1} parent=0
    _
  %s8 = ssub.s32 1, %s6
  %s9 = scalar_select 0, %s8, %s6
  $region1: #{tpu_custom_call.1} parent=0
    #allocation2 [shape = 'u8[32768]{0}', space=vmem, size = 0x8000, scoped, tag = 'input window, operand 0, single buffered']
    #allocation3 [shape = 's32[1]{0}', space=sflag, size = 0x4, scoped, tag = 'scoped memory for tpu_custom_call.1']
    #allocation4 [shape = 's32[1]{0}', space=sflag, size = 0x4, scoped, tag = 'scoped memory for tpu_custom_call.1']
    #allocation5 [shape = 'u8[32768]{0}', space=vmem, size = 0x8000, scoped, tag = 'output window, operand 0, single buffered']
    %10 = vsyncpa [#allocation3], 0
    %11 = vsyncpa [#allocation4], 0
    // Predicated region
    $region2: #{tpu_custom_call.1} parent=1 // pred_check
      _
    $region3: #{tpu_custom_call.1} parent=1 // pred_check_branch
      %13 = sbr.rel (0) target = $region5
    $region4: #{tpu_custom_call.1} parent=1 // pred_region
      %s15 = ssub.s32 1024, 1024
      %16 = vsyncadd [#allocation3], %s15
      %s17 = sshll.u32 [#allocation2], 4
      %s18 = int_to_ptr.vmem [resolvable:$true] %s17
      %23 = dma.hbm_to_vmem [thread:$0]  %s0, 1024, %s18, [#allocation3], 128, 128, 8
    $region5: #{tpu_custom_call.1} parent=1 // pred_fallthru
      _
    // Predicated region
    $region6: #{tpu_custom_call.1} parent=1 // pred_check
      _
    $region7: #{tpu_custom_call.1} parent=1 // pred_check_branch
      %25 = sbr.rel (0) target = $region9
    $region8: #{tpu_custom_call.1} parent=1 // pred_region
      _
    $region9: #{tpu_custom_call.1} parent=1 // pred_fallthru
      _
    // Predicated region
    $region10: #{tpu_custom_call.1} parent=1 // pred_check
      _
    $region11: #{tpu_custom_call.1} parent=1 // pred_check_branch
      %27 = sbr.rel (0) target = $region13
    $region12: #{tpu_custom_call.1} parent=1 // pred_region
      _
    $region13: #{tpu_custom_call.1} parent=1 // pred_fallthru
      _
    // Predicated region
    $region14: #{tpu_custom_call.1} parent=1 // pred_check
      _
    $region15: #{tpu_custom_call.1} parent=1 // pred_check_branch
      %29 = sbr.rel (0) target = $region17
    $region16: #{tpu_custom_call.1} parent=1 // pred_region
      _
    $region17: #{tpu_custom_call.1} parent=1 // pred_fallthru
      _
    // Predicated region
    $region18: #{tpu_custom_call.1} parent=1 // pred_check
      _
    $region19: #{tpu_custom_call.1} parent=1 // pred_check_branch
      %31 = sbr.rel (0) target = $region21
    $region20: #{tpu_custom_call.1} parent=1 // pred_region
      _
    $region21: #{tpu_custom_call.1} parent=1 // pred_fallthru
      _
    // Predicated region
    $region22: #{tpu_custom_call.1} parent=1 // pred_check
      _
    $region23: #{tpu_custom_call.1} parent=1 // pred_check_branch
      %33 = sbr.rel (0) target = $region25
    $region24: #{tpu_custom_call.1} parent=1 // pred_region
      %34 = dma.done [#allocation3], 1024
    $region25: #{tpu_custom_call.1} parent=1 // pred_fallthru
      _
    %v35 = vld [vmem:[#allocation2] sm:$0xff]
    %v36 = vld [vmem:[#allocation2 + $0x8] sm:$0xff]
    %v37 = vld [vmem:[#allocation2 + $0x10] sm:$0xff]
    %v38 = vld [vmem:[#allocation2 + $0x18] sm:$0xff]
    %v39 = vld [vmem:[#allocation2 + $0x20] sm:$0xff]
    %v40 = vld [vmem:[#allocation2 + $0x28] sm:$0xff]
    %v41 = vld [vmem:[#allocation2 + $0x30] sm:$0xff]
    %v42 = vld [vmem:[#allocation2 + $0x38] sm:$0xff]
    %43 = vadd.xlane.f32.xlu0 %v35
    %v44 = vpop.xlane.xlu0 %43
    %45 = vadd.xlane.f32.xlu0 %v36
    %v46 = vpop.xlane.xlu0 %45
    %47 = vadd.xlane.f32.xlu0 %v37
    %v48 = vpop.xlane.xlu0 %47
    %49 = vadd.xlane.f32.xlu0 %v38
    %v50 = vpop.xlane.xlu0 %49
    %51 = vadd.xlane.f32.xlu0 %v39
    %v52 = vpop.xlane.xlu0 %51
    %53 = vadd.xlane.f32.xlu0 %v40
    %v54 = vpop.xlane.xlu0 %53
    %55 = vadd.xlane.f32.xlu0 %v41
    %v56 = vpop.xlane.xlu0 %55
    %57 = vadd.xlane.f32.xlu0 %v42
    %v58 = vpop.xlane.xlu0 %57
    %v59 = vmul.f32 %v44, 0.0078125
    %v60 = vmul.f32 %v46, 0.0078125
    %v61 = vmul.f32 %v48, 0.0078125
    %v62 = vmul.f32 %v50, 0.0078125
    %v63 = vmul.f32 %v52, 0.0078125
    %v64 = vmul.f32 %v54, 0.0078125
    %v65 = vmul.f32 %v56, 0.0078125
    %v66 = vmul.f32 %v58, 0.0078125
    %v67 = vld [vmem:[%s1] sm:$0xff]
    %v68 = vld [vmem:[%s1 + $0x8] sm:$0xff]
    %v69 = vld [vmem:[%s1 + $0x10] sm:$0xff]
    %v70 = vld [vmem:[%s1 + $0x18] sm:$0xff]
    %v71 = vld [vmem:[%s2] sm:$0x1]
    %v73 = vlaneseq
    %v74 = vshrl.u32 %v73, 7
    %v75 = vsub.s32 0, %v74
    %v76 = vrot.slane %v71, %v75
    %v86 = vlaneseq
    %v87 = vand.u32 %v86, 127
    %v88 = vlaneseq
    %v89 = vshrl.u32 %v88, 7
    %v90 = vsub.s32 %v87, %v89
    %v91 = vrot.slane %v59, %v90
    %v92 = vadd.s32 %v87, 4294967288
    %v93 = vlaneseq
    %v94 = vshrl.u32 %v93, 7
    %v95 = vsub.s32 %v92, %v94
    %v96 = vrot.slane %v60, %v95
    %vm97 = vcmask 130112
    %v98 = vsel %vm97, %v96, %v91
    %v99 = vadd.s32 %v87, 4294967280
    %v100 = vlaneseq
    %v101 = vshrl.u32 %v100, 7
    %v102 = vsub.s32 %v99, %v101
    %v103 = vrot.slane %v61, %v102
    %vm104 = vcmask 195712
    %v105 = vsel %vm104, %v103, %v98
    %v106 = vadd.s32 %v87, 4294967272
    %v107 = vlaneseq
    %v108 = vshrl.u32 %v107, 7
    %v109 = vsub.s32 %v106, %v108
    %v110 = vrot.slane %v62, %v109
    %vm111 = vcmask 261312
    %v112 = vsel %vm111, %v110, %v105
    %v113 = vlaneseq
    %v114 = vshrl.u32 %v113, 7
    %v115 = vsub.s32 %v87, %v114
    %v116 = vrot.slane %v63, %v115
    %v117 = vlaneseq
    %v118 = vshrl.u32 %v117, 7
    %v119 = vsub.s32 %v92, %v118
    %v120 = vrot.slane %v64, %v119
    %v121 = vsel %vm97, %v120, %v116
    %v122 = vlaneseq
    %v123 = vshrl.u32 %v122, 7
    %v124 = vsub.s32 %v99, %v123
    %v125 = vrot.slane %v65, %v124
    %v126 = vsel %vm104, %v125, %v121
    %v127 = vlaneseq
    %v128 = vshrl.u32 %v127, 7
    %v129 = vsub.s32 %v106, %v128
    %v130 = vrot.slane %v66, %v129
    %v131 = vsel %vm111, %v130, %v126
    %vm132 = vcmask 1041409
    %v133 = vsel %vm132, %v131, %v112
    %vm134 = vcmask 261120
    %v135 = vsel %vm134, %v133, 0
    %137 = vmatprep.subr.mxu0 0.0
    %138 = vmatpush1.msra.mxu0 %v67
    %139 = vmatprep.subr.mxu0 0.0
    %140 = vmatpush1.msra.mxu0 %v68
    %141 = vmatprep.subr.mxu0 0.0
    %142 = vmatpush1.msra.mxu0 %v69
    %143 = vmatprep.subr.mxu0 0.0
    %144 = vmatpush1.msra.mxu0 %v70
    %145 = vmatprep.subr.mxu0 0.0
    %146 = vmatpush1.msra.mxu0 0.0
    %147 = vmatprep.subr.mxu0 0.0
    %148 = vmatpush1.msra.mxu0 0.0
    %149 = vmatprep.subr.mxu0 0.0
    %150 = vmatpush1.msra.mxu0 0.0
    %151 = vmatprep.subr.mxu0 0.0
    %152 = vmatpush1.msra.mxu0 0.0
    %153 = vmatprep.subr.mxu0 0.0
    %154 = vmatpush1.msra.mxu0 0.0
    %155 = vmatprep.subr.mxu0 0.0
    %156 = vmatpush1.msra.mxu0 0.0
    %157 = vmatprep.subr.mxu0 0.0
    %158 = vmatpush1.msra.mxu0 0.0
    %159 = vmatprep.subr.mxu0 0.0
    %160 = vmatpush1.msra.mxu0 0.0
    %161 = vmatprep.subr.mxu0 0.0
    %162 = vmatpush1.msra.mxu0 0.0
    %163 = vmatprep.subr.mxu0 0.0
    %164 = vmatpush1.msra.mxu0 0.0
    %165 = vmatprep.subr.mxu0 0.0
    %166 = vmatpush1.msra.mxu0 0.0
    %167 = vmatprep.subr.mxu0 0.0
    %168 = vmatpush1.msra.mxu0 0.0
    %169 = vmatprep.subr.mxu0 0.0
    %170 = vmatpush1.msra.mxu0 0.0
    %171 = vmatprep.subr.mxu0 0.0
    %172 = vmatpush1.msra.mxu0 0.0
    %173 = vmatprep.subr.mxu0 0.0
    %174 = vmatpush1.msra.mxu0 0.0
    %175 = vmatprep.subr.mxu0 0.0
    %176 = vmatpush1.msra.mxu0 0.0
    %177 = vmatprep.subr.mxu0 0.0
    %178 = vmatpush1.msra.mxu0 0.0
    %179 = vmatprep.subr.mxu0 0.0
    %180 = vmatpush1.msra.mxu0 0.0
    %181 = vmatprep.subr.mxu0 0.0
    %182 = vmatpush1.msra.mxu0 0.0
    %183 = vmatprep.subr.mxu0 0.0
    %184 = vmatpush1.msra.mxu0 0.0
    %185 = vmatprep.subr.mxu0 0.0
    %186 = vmatpush1.msra.mxu0 0.0
    %187 = vmatprep.subr.mxu0 0.0
    %188 = vmatpush1.msra.mxu0 0.0
    %189 = vmatprep.subr.mxu0 0.0
    %190 = vmatpush1.msra.mxu0 0.0
    %191 = vmatprep.subr.mxu0 0.0
    %192 = vmatpush1.msra.mxu0 0.0
    %193 = vmatprep.subr.mxu0 0.0
    %194 = vmatpush1.msra.mxu0 0.0
    %195 = vmatprep.subr.mxu0 0.0
    %196 = vmatpush1.msra.mxu0 0.0
    %197 = vmatprep.subr.mxu0 0.0
    %198 = vmatpush1.msra.mxu0 0.0
    %199 = vmatprep.subr.mxu0 0.0
    %200 = vmatpush1.msra.mxu0 0.0
    %201 = vmatprep.mubr.f32.mxu0 0.0
    %202 = vmatmul.mubr.f32.gmra.mrb[0].mxu0 %v135
    %v203 = vpop.f32.mrb[0].mxu0
    %v204 = vadd.f32 %v76, %v203
    %v205 = vpop.f32.mrb[0].mxu0
    %206 = vdwg.mxu0
    %v207 = vmax.f32 %v204, 0.0
    %v208 = vld [vmem:[%s3] sm:$0xff]
    %v209 = vld [vmem:[%s3 + $0x8] sm:$0xff]
    %v210 = vld [vmem:[%s4] sm:$0x1]
    %v212 = vlaneseq
    %v213 = vshrl.u32 %v212, 7
    %v214 = vsub.s32 0, %v213
    %v215 = vrot.slane %v210, %v214
    %vm217 = vcmask 130048
    %v219 = vsel %vm217, %v207, 0
    %221 = vmatprep.subr.mxu0 0.0
    %222 = vmatpush1.msra.mxu0 %v208
    %223 = vmatprep.subr.mxu0 0.0
    %224 = vmatpush1.msra.mxu0 %v209
    %225 = vmatprep.subr.mxu0 0.0
    %226 = vmatpush1.msra.mxu0 0.0
    %227 = vmatprep.subr.mxu0 0.0
    %228 = vmatpush1.msra.mxu0 0.0
    %229 = vmatprep.subr.mxu0 0.0
    %230 = vmatpush1.msra.mxu0 0.0
    %231 = vmatprep.subr.mxu0 0.0
    %232 = vmatpush1.msra.mxu0 0.0
    %233 = vmatprep.subr.mxu0 0.0
    %234 = vmatpush1.msra.mxu0 0.0
    %235 = vmatprep.subr.mxu0 0.0
    %236 = vmatpush1.msra.mxu0 0.0
    %237 = vmatprep.subr.mxu0 0.0
    %238 = vmatpush1.msra.mxu0 0.0
    %239 = vmatprep.subr.mxu0 0.0
    %240 = vmatpush1.msra.mxu0 0.0
    %241 = vmatprep.subr.mxu0 0.0
    %242 = vmatpush1.msra.mxu0 0.0
    %243 = vmatprep.subr.mxu0 0.0
    %244 = vmatpush1.msra.mxu0 0.0
    %245 = vmatprep.subr.mxu0 0.0
    %246 = vmatpush1.msra.mxu0 0.0
    %247 = vmatprep.subr.mxu0 0.0
    %248 = vmatpush1.msra.mxu0 0.0
    %249 = vmatprep.subr.mxu0 0.0
    %250 = vmatpush1.msra.mxu0 0.0
    %251 = vmatprep.subr.mxu0 0.0
    %252 = vmatpush1.msra.mxu0 0.0
    %253 = vmatprep.subr.mxu0 0.0
    %254 = vmatpush1.msra.mxu0 0.0
    %255 = vmatprep.subr.mxu0 0.0
    %256 = vmatpush1.msra.mxu0 0.0
    %257 = vmatprep.subr.mxu0 0.0
    %258 = vmatpush1.msra.mxu0 0.0
    %259 = vmatprep.subr.mxu0 0.0
    %260 = vmatpush1.msra.mxu0 0.0
    %261 = vmatprep.subr.mxu0 0.0
    %262 = vmatpush1.msra.mxu0 0.0
    %263 = vmatprep.subr.mxu0 0.0
    %264 = vmatpush1.msra.mxu0 0.0
    %265 = vmatprep.subr.mxu0 0.0
    %266 = vmatpush1.msra.mxu0 0.0
    %267 = vmatprep.subr.mxu0 0.0
    %268 = vmatpush1.msra.mxu0 0.0
    %269 = vmatprep.subr.mxu0 0.0
    %270 = vmatpush1.msra.mxu0 0.0
    %271 = vmatprep.subr.mxu0 0.0
    %272 = vmatpush1.msra.mxu0 0.0
    %273 = vmatprep.subr.mxu0 0.0
    %274 = vmatpush1.msra.mxu0 0.0
    %275 = vmatprep.subr.mxu0 0.0
    %276 = vmatpush1.msra.mxu0 0.0
    %277 = vmatprep.subr.mxu0 0.0
    %278 = vmatpush1.msra.mxu0 0.0
    %279 = vmatprep.subr.mxu0 0.0
    %280 = vmatpush1.msra.mxu0 0.0
    %281 = vmatprep.subr.mxu0 0.0
    %282 = vmatpush1.msra.mxu0 0.0
    %283 = vmatprep.subr.mxu0 0.0
    %284 = vmatpush1.msra.mxu0 0.0
    %285 = vmatprep.mubr.f32.mxu0 0.0
    %286 = vmatmul.mubr.f32.gmra.mrb[0].mxu0 %v219
    %v287 = vpop.f32.mrb[0].mxu0
    %v288 = vadd.f32 %v215, %v287
    %v289 = vpop.f32.mrb[0].mxu0
    %290 = vdwg.mxu0
    %v291 = vsub.f32 0.0, %v288
    %v292 = vmul.f32 %v291, 1.442695
    %v293 = vpow.pop %v292
    %v294 = vadd.f32 %v293, 1.0
    %v295 = vrcp.pop %v294
    %v296 = vmul.f32 1.0, %v295
    %v297 = vlaneseq
    %v298 = vshrl.u32 %v297, 7
    %v299 = vsub.s32 0, %v298
    %v300 = vrot.slane %v296, %v299
    %302 = vbcast.lane.b32.xlu0 %v300, 256
    %v303 = vpop.permute.xlu0 %302
    %s305 = sor.u32 256, 8
    %306 = vbcast.lane.b32.xlu0 %v300, %s305
    %v307 = vpop.permute.xlu0 %306
    %s309 = sor.u32 256, 16
    %310 = vbcast.lane.b32.xlu0 %v300, %s309
    %v311 = vpop.permute.xlu0 %310
    %s313 = sor.u32 256, 24
    %314 = vbcast.lane.b32.xlu0 %v300, %s313
    %v315 = vpop.permute.xlu0 %314
    %v316 = vlaneseq
    %v317 = vshrl.u32 %v316, 7
    %v318 = vsub.s32 1, %v317
    %v319 = vrot.slane %v296, %v318
    %321 = vbcast.lane.b32.xlu0 %v319, 256
    %v322 = vpop.permute.xlu0 %321
    %s324 = sor.u32 256, 8
    %325 = vbcast.lane.b32.xlu0 %v319, %s324
    %v326 = vpop.permute.xlu0 %325
    %s328 = sor.u32 256, 16
    %329 = vbcast.lane.b32.xlu0 %v319, %s328
    %v330 = vpop.permute.xlu0 %329
    %s332 = sor.u32 256, 24
    %333 = vbcast.lane.b32.xlu0 %v319, %s332
    %v334 = vpop.permute.xlu0 %333
    %v335 = vmul.f32 %v35, %v303
    %v336 = vmul.f32 %v36, %v307
    %v337 = vmul.f32 %v37, %v311
    %v338 = vmul.f32 %v38, %v315
    %v339 = vmul.f32 %v39, %v322
    %v340 = vmul.f32 %v40, %v326
    %v341 = vmul.f32 %v41, %v330
    %v342 = vmul.f32 %v42, %v334
    %343 = vst [vmem:[#allocation5] sm:$0xff] %v335
    %344 = vst [vmem:[#allocation5 + $0x8] sm:$0xff] %v336
    %345 = vst [vmem:[#allocation5 + $0x10] sm:$0xff] %v337
    %346 = vst [vmem:[#allocation5 + $0x18] sm:$0xff] %v338
    %347 = vst [vmem:[#allocation5 + $0x20] sm:$0xff] %v339
    %348 = vst [vmem:[#allocation5 + $0x28] sm:$0xff] %v340
    %349 = vst [vmem:[#allocation5 + $0x30] sm:$0xff] %v341
    %350 = vst [vmem:[#allocation5 + $0x38] sm:$0xff] %v342
    // Predicated region
    $region26: #{tpu_custom_call.1} parent=1 // pred_check
      _
    $region27: #{tpu_custom_call.1} parent=1 // pred_check_branch
      %352 = sbr.rel (0) target = $region29
    $region28: #{tpu_custom_call.1} parent=1 // pred_region
      %s354 = ssub.s32 1024, 1024
      %355 = vsyncadd [#allocation4], %s354
      %s356 = sshll.u32 [#allocation5], 4
      %s357 = int_to_ptr.vmem [resolvable:$true] %s356
      %362 = dma.vmem_to_hbm [thread:$0]  %s357, 1024, %s5, [#allocation4], 128, 128, 8
    $region29: #{tpu_custom_call.1} parent=1 // pred_fallthru
      _
    // Predicated region
    $region30: #{tpu_custom_call.1} parent=1 // pred_check
      _
    $region31: #{tpu_custom_call.1} parent=1 // pred_check_branch
      %364 = sbr.rel (0) target = $region33
    $region32: #{tpu_custom_call.1} parent=1 // pred_region
      %365 = dma.done [#allocation4], 1024
    $region33: #{tpu_custom_call.1} parent=1 // pred_fallthru
      _
    %366 = vsyncpa [#allocation3], 1
    %367 = vsyncpa [#allocation4], 1

</llo_original>
